<compile_context>
chip_gen: v5e
topology: v5e:2x2
jax: 0.10.0
libtpu: 0.0.40
codegen_flags: <defaults>
</compile_context>

<pallas_src>
import jax
import jax.numpy as jnp
from jax import lax
from jax.experimental import pallas as pl
from jax.experimental.pallas import tpu as pltpu


def _rpn_head_kernel(x_ref, w9_ref, b1_ref, wh_ref, bh_ref, out_ref):
    # x_ref:   (1, H+2, W+2, C)   spatially padded input image (one batch elem)
    # w9_ref:  (9C, C)            3x3 conv weights, (kh, kw, cin) folded row-major
    # b1_ref:  (1, C)             3x3 conv bias (f32)
    # wh_ref:  (C, OUT_PAD)       fused [cls | bbox | zero-pad] 1x1 head weights
    # bh_ref:  (1, OUT_PAD)       fused head bias (f32, zero-padded)
    # out_ref: (1, TH*W, OUT_PAD) lane-dense output slab for this row band
    Wp2 = x_ref.shape[2]
    C = x_ref.shape[3]
    W = Wp2 - 2
    M = out_ref.shape[1]          # TH * W
    TH = M // W

    r = pl.program_id(1)
    row0 = r * TH                 # first padded row touched by the kh=0 tap

    # im2col for this band: (TH, W, 9C), kh-major then kw, matching w9 layout.
    patches = jnp.concatenate(
        [x_ref[0, pl.ds(row0 + kh, TH), kw:kw + W, :]
         for kh in range(3) for kw in range(3)],
        axis=-1)

    # 3x3 "same" conv for the whole band as a single MXU matmul (K = 9C).
    acc = jnp.dot(patches.reshape(M, 9 * C), w9_ref[...],
                  preferred_element_type=jnp.float32)
    hidden = jnp.maximum(acc + b1_ref[...], 0.0).astype(wh_ref.dtype)  # (M, C)

    # Fused classification + bbox 1x1 heads: one lane-dense matmul.
    head = jnp.dot(hidden, wh_ref[...],
                   preferred_element_type=jnp.float32) + bh_ref[...]

    out_ref[...] = head.reshape(out_ref.shape).astype(out_ref.dtype)


def _pick_band_rows(H, W, band_rows):
    """Largest divisor of H (<= band_rows) with TH*W a multiple of 8."""
    for th in range(min(band_rows, H), 0, -1):
        if H % th == 0 and (th * W) % 8 == 0:
            return th
    return H   # full-extent block is always legal


def rpn_head_forward(feature_map_nchw, params, *, band_rows=8,
                     compute_dtype=jnp.bfloat16):
    """Forward pass matching RPNHead.forward.

    feature_map_nchw: (N, C, H, W) float32
    Returns (class_logits, bboxes_delta, sigma_bboxes) with
      class_logits: (N, A, H, W), bboxes_delta: (N, 4A, H, W), sigma_bboxes: None
    """
    w1, b1, wc, bc, wb, bb = (params["w1"], params["b1"], params["wc"],
                              params["bc"], params["wb"], params["bb"])
    N, C, H, W = feature_map_nchw.shape
    A = wc.shape[1]
    A4 = wb.shape[1]
    OUT = A + A4                                     # 5A
    OUT_PAD = max(128, ((OUT + 127) // 128) * 128)   # lane-dense output width

    TH = _pick_band_rows(H, W, band_rows)
    n_bands = H // TH

    # NCHW -> NHWC, cast to compute dtype, pad spatial dims ("same" padding).
    x_nhwc = jnp.transpose(feature_map_nchw, (0, 2, 3, 1)).astype(compute_dtype)
    x_pad = jnp.pad(x_nhwc, ((0, 0), (1, 1), (1, 1), (0, 0)))

    # Conv weight: (3,3,C,C) -> (9C, C); (kh, kw, cin) folded row-major so it
    # lines up with the kernel's kh-major / kw-minor patch concatenation.
    w9 = w1.astype(compute_dtype).reshape(9 * C, C)
    b1_2d = b1.reshape(1, C).astype(jnp.float32)

    # Fused head weight/bias, zero-padded to the lane-dense width.
    wh = jnp.concatenate([wc, wb], axis=1).astype(compute_dtype)      # (C, 5A)
    wh = jnp.pad(wh, ((0, 0), (0, OUT_PAD - OUT)))
    bh = jnp.concatenate([bc, bb]).reshape(1, OUT).astype(jnp.float32)
    bh = jnp.pad(bh, ((0, 0), (0, OUT_PAD - OUT)))

    out_slab = pl.pallas_call(
        _rpn_head_kernel,
        out_shape=jax.ShapeDtypeStruct((N, H * W, OUT_PAD), jnp.float32),
        grid_spec=pltpu.PrefetchScalarGridSpec(
            num_scalar_prefetch=0,
            grid=(N, n_bands),
            in_specs=[
                # Whole padded image resident per batch element; block index is
                # constant across the band axis so it is DMA'd once per image.
                pl.BlockSpec((1, H + 2, W + 2, C), lambda n, r: (n, 0, 0, 0)),
                pl.BlockSpec((9 * C, C), lambda n, r: (0, 0)),
                pl.BlockSpec((1, C), lambda n, r: (0, 0)),
                pl.BlockSpec((C, OUT_PAD), lambda n, r: (0, 0)),
                pl.BlockSpec((1, OUT_PAD), lambda n, r: (0, 0)),
            ],
            out_specs=pl.BlockSpec((1, TH * W, OUT_PAD),
                                   lambda n, r: (n, r, 0)),
        ),
        compiler_params=pltpu.CompilerParams(
            dimension_semantics=("parallel", "parallel")),
    )(x_pad, w9, b1_2d, wh, bh)

    # Lane-dense slab -> (N, A, H, W) / (N, 4A, H, W)  (cheap wrapper plumbing).
    out_dtype = feature_map_nchw.dtype
    cls = out_slab[..., :A].reshape(N, H, W, A)
    bbox = out_slab[..., A:OUT].reshape(N, H, W, A4)
    class_logits = jnp.transpose(cls, (0, 3, 1, 2)).astype(out_dtype)
    bboxes_delta = jnp.transpose(bbox, (0, 3, 1, 2)).astype(out_dtype)
    sigma_bboxes = None
    return class_logits, bboxes_delta, sigma_bboxes


def init_rpn_head_params(key, in_channels, num_anchors):
    """Deterministic init mirroring the module: normal(std=0.01) weights, bias=0.001."""
    k1, k2, k3 = jax.random.split(key, 3)
    C, A = in_channels, num_anchors
    w1 = 0.01 * jax.random.normal(k1, (3, 3, C, C), jnp.float32)
    wc = 0.01 * jax.random.normal(k2, (C, A), jnp.float32)
    wb = 0.01 * jax.random.normal(k3, (C, 4 * A), jnp.float32)
    return {
        "w1": w1, "b1": jnp.full((C,), 0.001, jnp.float32),
        "wc": wc, "bc": jnp.full((A,), 0.001, jnp.float32),
        "wb": wb, "bb": jnp.full((4 * A,), 0.001, jnp.float32),
    }


def _reference_forward(x_nchw, params):
    """Pure-JAX f32 reference (lax.conv) for correctness checking."""
    x = jnp.transpose(x_nchw, (0, 2, 3, 1))
    h = lax.conv_general_dilated(
        x, params["w1"], window_strides=(1, 1), padding="SAME",
        dimension_numbers=("NHWC", "HWIO", "NHWC")) + params["b1"]
    h = jnp.maximum(h, 0.0)
    cls = jnp.einsum("nhwc,ca->nhwa", h, params["wc"]) + params["bc"]
    bbox = jnp.einsum("nhwc,cb->nhwb", h, params["wb"]) + params["bb"]
    return (jnp.transpose(cls, (0, 3, 1, 2)),
            jnp.transpose(bbox, (0, 3, 1, 2)))


if __name__ == "__main__":
    key = jax.random.PRNGKey(0)
    k_params, k_x = jax.random.split(key)

    N, C, H, W = 2, 8, 16, 16
    num_anchors = 3

    params = init_rpn_head_params(k_params, C, num_anchors)
    x = jax.random.normal(k_x, (N, C, H, W), jnp.float32)

    ref_cls, ref_bbox = _reference_forward(x, params)

    # f32 compute path: exact-ish match against the lax.conv reference.
    cls32, bbox32, sigma32 = rpn_head_forward(x, params,
                                              compute_dtype=jnp.float32)
    jax.block_until_ready((cls32, bbox32))
    assert cls32.shape == (N, num_anchors, H, W)
    assert bbox32.shape == (N, 4 * num_anchors, H, W)
    assert sigma32 is None
    assert jnp.allclose(cls32, ref_cls, atol=1e-4, rtol=1e-4)
    assert jnp.allclose(bbox32, ref_bbox, atol=1e-4, rtol=1e-4)

    # Default bf16 compute path (f32 accumulation): looser tolerance.
    cls, bbox, sigma = rpn_head_forward(x, params)
    jax.block_until_ready((cls, bbox))
    assert cls.shape == (N, num_anchors, H, W)
    assert bbox.shape == (N, 4 * num_anchors, H, W)
    assert sigma is None
    assert jnp.allclose(cls, ref_cls, atol=2e-3, rtol=2e-2)
    assert jnp.allclose(bbox, ref_bbox, atol=2e-3, rtol=2e-2)

    print("KERNEL_OK")
</pallas_src>

<mosaic_0001>
module attributes {stable_mosaic.version = 11 : i64} {
  func.func @_rpn_head_kernel(%arg0: i32, %arg1: i32, %arg2: memref<1x18x18x8xf32, #tpu.memory_space<vmem>>, %arg3: memref<72x8xf32, #tpu.memory_space<vmem>>, %arg4: memref<1x8xf32, #tpu.memory_space<vmem>>, %arg5: memref<8x128xf32, #tpu.memory_space<vmem>>, %arg6: memref<1x128xf32, #tpu.memory_space<vmem>>, %arg7: memref<1x128x128xf32, #tpu.memory_space<vmem>>) attributes {dimension_semantics = [#tpu.dimension_semantics<parallel>, #tpu.dimension_semantics<parallel>], iteration_bounds = array<i64: 2, 2>, scalar_prefetch = 0 : i64, scratch_operands = 0 : i64, tpu.core_type = #tpu.core_type<tc>, window_params = [{transform_indices = @transform_0, window_bounds = array<i64: 1, 18, 18, 8>}, {pipeline_mode = #tpu.pipeline_mode<synchronous>, transform_indices = @transform_1, window_bounds = array<i64: 72, 8>}, {pipeline_mode = #tpu.pipeline_mode<synchronous>, transform_indices = @transform_2, window_bounds = array<i64: 1, 8>}, {pipeline_mode = #tpu.pipeline_mode<synchronous>, transform_indices = @transform_3, window_bounds = array<i64: 8, 128>}, {pipeline_mode = #tpu.pipeline_mode<synchronous>, transform_indices = @transform_4, window_bounds = array<i64: 1, 128>}, {transform_indices = @transform_5, window_bounds = array<i64: 1, 128, 128>}]} {
    %c8_i32 = arith.constant 8 : i32
    %0 = arith.muli %arg1, %c8_i32 : i32
    %c0_i32 = arith.constant 0 : i32
    %1 = arith.addi %0, %c0_i32 : i32
    %c0 = arith.constant 0 : index
    %2 = arith.index_cast %1 : i32 to index
    %c0_0 = arith.constant 0 : index
    %c0_1 = arith.constant 0 : index
    %3 = vector.load %arg2[%c0, %2, %c0_0, %c0_1] : memref<1x18x18x8xf32, #tpu.memory_space<vmem>>, vector<1x8x16x8xf32>
    %4 = vector.shape_cast %3 : vector<1x8x16x8xf32> to vector<8x16x8xf32>
    %c0_i32_2 = arith.constant 0 : i32
    %5 = arith.addi %0, %c0_i32_2 : i32
    %c0_3 = arith.constant 0 : index
    %6 = arith.index_cast %5 : i32 to index
    %c1 = arith.constant 1 : index
    %c0_4 = arith.constant 0 : index
    %7 = vector.load %arg2[%c0_3, %6, %c1, %c0_4] : memref<1x18x18x8xf32, #tpu.memory_space<vmem>>, vector<1x8x16x8xf32>
    %8 = vector.shape_cast %7 : vector<1x8x16x8xf32> to vector<8x16x8xf32>
    %c0_i32_5 = arith.constant 0 : i32
    %9 = arith.addi %0, %c0_i32_5 : i32
    %c0_6 = arith.constant 0 : index
    %10 = arith.index_cast %9 : i32 to index
    %c2 = arith.constant 2 : index
    %c0_7 = arith.constant 0 : index
    %11 = vector.load %arg2[%c0_6, %10, %c2, %c0_7] : memref<1x18x18x8xf32, #tpu.memory_space<vmem>>, vector<1x8x16x8xf32>
    %12 = vector.shape_cast %11 : vector<1x8x16x8xf32> to vector<8x16x8xf32>
    %c1_i32 = arith.constant 1 : i32
    %13 = arith.addi %0, %c1_i32 : i32
    %c0_8 = arith.constant 0 : index
    %14 = arith.index_cast %13 : i32 to index
    %c0_9 = arith.constant 0 : index
    %c0_10 = arith.constant 0 : index
    %15 = vector.load %arg2[%c0_8, %14, %c0_9, %c0_10] : memref<1x18x18x8xf32, #tpu.memory_space<vmem>>, vector<1x8x16x8xf32>
    %16 = vector.shape_cast %15 : vector<1x8x16x8xf32> to vector<8x16x8xf32>
    %c1_i32_11 = arith.constant 1 : i32
    %17 = arith.addi %0, %c1_i32_11 : i32
    %c0_12 = arith.constant 0 : index
    %18 = arith.index_cast %17 : i32 to index
    %c1_13 = arith.constant 1 : index
    %c0_14 = arith.constant 0 : index
    %19 = vector.load %arg2[%c0_12, %18, %c1_13, %c0_14] : memref<1x18x18x8xf32, #tpu.memory_space<vmem>>, vector<1x8x16x8xf32>
    %20 = vector.shape_cast %19 : vector<1x8x16x8xf32> to vector<8x16x8xf32>
    %c1_i32_15 = arith.constant 1 : i32
    %21 = arith.addi %0, %c1_i32_15 : i32
    %c0_16 = arith.constant 0 : index
    %22 = arith.index_cast %21 : i32 to index
    %c2_17 = arith.constant 2 : index
    %c0_18 = arith.constant 0 : index
    %23 = vector.load %arg2[%c0_16, %22, %c2_17, %c0_18] : memref<1x18x18x8xf32, #tpu.memory_space<vmem>>, vector<1x8x16x8xf32>
    %24 = vector.shape_cast %23 : vector<1x8x16x8xf32> to vector<8x16x8xf32>
    %c2_i32 = arith.constant 2 : i32
    %25 = arith.addi %0, %c2_i32 : i32
    %c0_19 = arith.constant 0 : index
    %26 = arith.index_cast %25 : i32 to index
    %c0_20 = arith.constant 0 : index
    %c0_21 = arith.constant 0 : index
    %27 = vector.load %arg2[%c0_19, %26, %c0_20, %c0_21] : memref<1x18x18x8xf32, #tpu.memory_space<vmem>>, vector<1x8x16x8xf32>
    %28 = vector.shape_cast %27 : vector<1x8x16x8xf32> to vector<8x16x8xf32>
    %c2_i32_22 = arith.constant 2 : i32
    %29 = arith.addi %0, %c2_i32_22 : i32
    %c0_23 = arith.constant 0 : index
    %30 = arith.index_cast %29 : i32 to index
    %c1_24 = arith.constant 1 : index
    %c0_25 = arith.constant 0 : index
    %31 = vector.load %arg2[%c0_23, %30, %c1_24, %c0_25] : memref<1x18x18x8xf32, #tpu.memory_space<vmem>>, vector<1x8x16x8xf32>
    %32 = vector.shape_cast %31 : vector<1x8x16x8xf32> to vector<8x16x8xf32>
    %c2_i32_26 = arith.constant 2 : i32
    %33 = arith.addi %0, %c2_i32_26 : i32
    %c0_27 = arith.constant 0 : index
    %34 = arith.index_cast %33 : i32 to index
    %c2_28 = arith.constant 2 : index
    %c0_29 = arith.constant 0 : index
    %35 = vector.load %arg2[%c0_27, %34, %c2_28, %c0_29] : memref<1x18x18x8xf32, #tpu.memory_space<vmem>>, vector<1x8x16x8xf32>
    %36 = vector.shape_cast %35 : vector<1x8x16x8xf32> to vector<8x16x8xf32>
    %37 = tpu.concatenate %4, %8, %12, %16, %20, %24, %28, %32, %36 in 2 : vector<8x16x8xf32>, vector<8x16x8xf32>, vector<8x16x8xf32>, vector<8x16x8xf32>, vector<8x16x8xf32>, vector<8x16x8xf32>, vector<8x16x8xf32>, vector<8x16x8xf32>, vector<8x16x8xf32> -> vector<8x16x72xf32>
    %38 = vector.shape_cast %37 : vector<8x16x72xf32> to vector<128x72xf32>
    %c0_30 = arith.constant 0 : index
    %c0_31 = arith.constant 0 : index
    %39 = vector.load %arg3[%c0_30, %c0_31] : memref<72x8xf32, #tpu.memory_space<vmem>>, vector<72x8xf32>
    %cst = arith.constant dense<0.000000e+00> : vector<128x8xf32>
    %40 = tpu.matmul %38, %39, %cst {dimension_numbers = #tpu.dot_dimension_numbers<[1], [0], [0], [1], [0, 0, 1, 1], [], []>} : vector<128x72xf32>, vector<72x8xf32>, vector<128x8xf32> -> vector<128x8xf32>
    %c0_32 = arith.constant 0 : index
    %c0_33 = arith.constant 0 : index
    %41 = vector.load %arg4[%c0_32, %c0_33] : memref<1x8xf32, #tpu.memory_space<vmem>>, vector<1x8xf32>
    %42 = vector.broadcast %41 : vector<1x8xf32> to vector<128x8xf32>
    %43 = arith.addf %40, %42 : vector<128x8xf32>
    %cst_34 = arith.constant 0.000000e+00 : f32
    %44 = vector.broadcast %cst_34 : f32 to vector<128x8xf32>
    %45 = arith.maximumf %43, %44 : vector<128x8xf32>
    %c0_35 = arith.constant 0 : index
    %c0_36 = arith.constant 0 : index
    %46 = vector.load %arg5[%c0_35, %c0_36] : memref<8x128xf32, #tpu.memory_space<vmem>>, vector<8x128xf32>
    %cst_37 = arith.constant dense<0.000000e+00> : vector<128x128xf32>
    %47 = tpu.matmul %45, %46, %cst_37 {dimension_numbers = #tpu.dot_dimension_numbers<[1], [0], [0], [1], [0, 0, 1, 1], [], []>} : vector<128x8xf32>, vector<8x128xf32>, vector<128x128xf32> -> vector<128x128xf32>
    %c0_38 = arith.constant 0 : index
    %c0_39 = arith.constant 0 : index
    %48 = vector.load %arg6[%c0_38, %c0_39] : memref<1x128xf32, #tpu.memory_space<vmem>>, vector<1x128xf32>
    %49 = vector.broadcast %48 : vector<1x128xf32> to vector<128x128xf32>
    %50 = arith.addf %47, %49 : vector<128x128xf32>
    %51 = vector.shape_cast %50 : vector<128x128xf32> to vector<1x128x128xf32>
    %c0_40 = arith.constant 0 : index
    %c0_41 = arith.constant 0 : index
    %c0_42 = arith.constant 0 : index
    %52 = vector.load %arg7[%c0_40, %c0_41, %c0_42] : memref<1x128x128xf32, #tpu.memory_space<vmem>>, vector<1x128x128xf32>
    tpu.vector_store %arg7[%c0_40, %c0_41, %c0_42], %51 {strides = array<i32>} : memref<1x128x128xf32, #tpu.memory_space<vmem>>, vector<1x128x128xf32>,
    return
  }
  func.func @transform_0(%arg0: i32, %arg1: i32) -> (i32, i32, i32, i32) {
    %c0_i32 = arith.constant 0 : i32
    %c0_i32_0 = arith.constant 0 : i32
    %c0_i32_1 = arith.constant 0 : i32
    %c0_i32_2 = arith.constant 0 : i32
    return %arg0, %c0_i32, %c0_i32_0, %c0_i32_1 : i32, i32, i32, i32
  }
  func.func @transform_1(%arg0: i32, %arg1: i32) -> (i32, i32) {
    %c0_i32 = arith.constant 0 : i32
    %c0_i32_0 = arith.constant 0 : i32
    %c0_i32_1 = arith.constant 0 : i32
    return %c0_i32, %c0_i32_0 : i32, i32
  }
  func.func @transform_2(%arg0: i32, %arg1: i32) -> (i32, i32) {
    %c0_i32 = arith.constant 0 : i32
    %c0_i32_0 = arith.constant 0 : i32
    %c0_i32_1 = arith.constant 0 : i32
    return %c0_i32, %c0_i32_0 : i32, i32
  }
  func.func @transform_3(%arg0: i32, %arg1: i32) -> (i32, i32) {
    %c0_i32 = arith.constant 0 : i32
    %c0_i32_0 = arith.constant 0 : i32
    %c0_i32_1 = arith.constant 0 : i32
    return %c0_i32, %c0_i32_0 : i32, i32
  }
  func.func @transform_4(%arg0: i32, %arg1: i32) -> (i32, i32) {
    %c0_i32 = arith.constant 0 : i32
    %c0_i32_0 = arith.constant 0 : i32
    %c0_i32_1 = arith.constant 0 : i32
    return %c0_i32, %c0_i32_0 : i32, i32
  }
  func.func @transform_5(%arg0: i32, %arg1: i32) -> (i32, i32, i32) {
    %c0_i32 = arith.constant 0 : i32
    %c0_i32_0 = arith.constant 0 : i32
    return %arg0, %arg1, %c0_i32 : i32, i32, i32
  }
}

</mosaic_0001>

<llo_original>
// kernel: tpu_custom_call.1
$region0: #{tpu_custom_call.1}
  #allocation0 [shape = 'u32[]', space=smem, size = 0x4, offset = 0x4, fixed_abs, tag = 'smem constant byte address 0x4 - core index']
  #allocation1 [shape = 'u32[72,128]{1,0:T(1,128)}', space=vmem, size = 0x9000, scoped, tag = 'internal scratch']
  %s0 = inlined_call_operand.vmem [shape: f32[2,18,18,8], index: 0, kind: input, shape index: {}]
  %s1 = inlined_call_operand.vmem [shape: f32[72,8], index: 1, kind: input, shape index: {}]
  %s2 = inlined_call_operand.vmem [shape: f32[1,8], index: 2, kind: input, shape index: {}]
  %s3 = inlined_call_operand.vmem [shape: f32[8,128], index: 3, kind: input, shape index: {}]
  %s4 = inlined_call_operand.vmem [shape: f32[1,128], index: 4, kind: input, shape index: {}]
  %s5 = inlined_call_operand.hbm [shape: f32[2,256,128], index: 5, kind: output, shape index: {}]
  %s6 = sld [smem:[#allocation0]]
  $region53: #{tpu_custom_call.1} parent=0
    _
  %s8 = ssub.s32 1, %s6
  %s9 = scalar_select 0, %s8, %s6
  $region1: #{tpu_custom_call.1} parent=0
    #allocation2 [shape = 'u8[131072]{0}', space=vmem, size = 0x20000, scoped, tag = 'output window, operand 0']
    #allocation3 [shape = 's32[2]{0}', space=sflag, size = 0x8, scoped, tag = 'scoped memory for tpu_custom_call.1']
    %10 = vsyncpa [#allocation3], 0
    %s11 = scalar_lea.sflag [#allocation3], 1
    %12 = vsyncpa %s11, 0
    loop: start=0, step=1, limit=6
    $region2: #{tpu_custom_call.1} parent=1 // loop_pre_header
      _
    $region3: #{tpu_custom_call.1} parent=1 // loop_header
      %s14 = sphi 0, %s18
      %p15 = scmp.ge.s32.totalorder %s14, 6
      %s21 = sphi 0, %s33
      %s22 = sphi 0, %s29
      %s23 = sphi 0, %s21
      %s24 = sphi 0, %s22
      %s25 = sphi 0, %s23
      %s26 = sphi 0, %s24
      %s36 = sphi 0, %s38
      %s39 = sphi 0, %s36
      %s40 = sphi 0, %s39
      %s56 = sphi 0, %s40
      %s60 = sphi 0, %s60
      %s62 = sphi 0, %s60
      %s63 = sphi 0, %s62
      %s77 = sphi 0, %s63
      %s81 = sphi 0, %s81
      %s83 = sphi 0, %s81
      %s84 = sphi 0, %s83
      %s98 = sphi 0, %s84
      %s102 = sphi 0, %s102
      %s104 = sphi 0, %s102
      %s105 = sphi 0, %s104
      %s119 = sphi 0, %s105
      %s123 = sphi 0, %s123
      %s125 = sphi 0, %s123
      %s126 = sphi 0, %s125
      %s140 = sphi 0, %s126
      %s148 = sphi 0, %s150
      %s151 = sphi 0, %s148
      %s152 = sphi 0, %s151
      %s168 = sphi 0, %s152
    $region4: #{tpu_custom_call.1} parent=1 // loop_header_branch
      %17 = sbr.rel (%p15) target = $region8
    $region5: #{tpu_custom_call.1} parent=1 // loop_body
      %s19 = ssub.s32 %s14, 1
      %s20 = ssub.s32 %s14, 2
      %s27 = sadd.s32 1, %s22
      %p28 = scmp.ge.s32.totalorder %s27, 2
      %s29 = scalar_select %p28, 0, %s27
      %s30 = sadd.s32 1, %s21
      %s31 = scalar_select %p28, %s30, %s21
      %p32 = scmp.ge.s32.totalorder %s31, 2
      %s33 = scalar_select %p32, 0, %s31
      %s34 = ssub.s32 %s21, %s33
      %p35 = scmp.eq.s32.totalorder %s34, 0
      %s37 = sadd.s32 %s36, 1
      %s38 = scalar_select %p35, %s36, %s37
      %p41 = pneg %p35
      %p42 = scmp.eq.s32.totalorder %s14, 3
      %p43 = por %p41, %p42
      %p44 = scmp.ne.s32.totalorder %s36, %s39
      %p45 = scmp.eq.s32.totalorder %s14, 0
      %p46 = por %p44, %p45
      %p47 = scmp.ne.s32.totalorder %s36, %s39
      %p48 = scmp.eq.s32.totalorder %s19, 3
      %p49 = por %p47, %p48
      %p50 = scmp.ne.s32.totalorder %s39, %s40
      %p51 = scmp.eq.s32.totalorder %s19, 0
      %p52 = por %p50, %p51
      %p53 = scmp.ne.s32.totalorder %s39, %s40
      %p54 = scmp.eq.s32.totalorder %s20, 3
      %p55 = por %p53, %p54
      %p57 = scmp.ne.s32.totalorder %s40, %s56
      %p58 = scmp.eq.s32.totalorder %s20, 0
      %p59 = por %p57, %p58
      %s61 = sadd.s32 %s60, 1
      %p64 = scmp.eq.s32.totalorder %s14, 3
      %p65 = scmp.ne.s32.totalorder %s60, %s62
      %p66 = scmp.eq.s32.totalorder %s14, 0
      %p67 = por %p65, %p66
      %p68 = scmp.ne.s32.totalorder %s60, %s62
      %p69 = scmp.eq.s32.totalorder %s19, 3
      %p70 = por %p68, %p69
      %p71 = scmp.ne.s32.totalorder %s62, %s63
      %p72 = scmp.eq.s32.totalorder %s19, 0
      %p73 = por %p71, %p72
      %p74 = scmp.ne.s32.totalorder %s62, %s63
      %p75 = scmp.eq.s32.totalorder %s20, 3
      %p76 = por %p74, %p75
      %p78 = scmp.ne.s32.totalorder %s63, %s77
      %p79 = scmp.eq.s32.totalorder %s20, 0
      %p80 = por %p78, %p79
      %s82 = sadd.s32 %s81, 1
      %p85 = scmp.eq.s32.totalorder %s14, 3
      %p86 = scmp.ne.s32.totalorder %s81, %s83
      %p87 = scmp.eq.s32.totalorder %s14, 0
      %p88 = por %p86, %p87
      %p89 = scmp.ne.s32.totalorder %s81, %s83
      %p90 = scmp.eq.s32.totalorder %s19, 3
      %p91 = por %p89, %p90
      %p92 = scmp.ne.s32.totalorder %s83, %s84
      %p93 = scmp.eq.s32.totalorder %s19, 0
      %p94 = por %p92, %p93
      %p95 = scmp.ne.s32.totalorder %s83, %s84
      %p96 = scmp.eq.s32.totalorder %s20, 3
      %p97 = por %p95, %p96
      %p99 = scmp.ne.s32.totalorder %s84, %s98
      %p100 = scmp.eq.s32.totalorder %s20, 0
      %p101 = por %p99, %p100
      %s103 = sadd.s32 %s102, 1
      %p106 = scmp.eq.s32.totalorder %s14, 3
      %p107 = scmp.ne.s32.totalorder %s102, %s104
      %p108 = scmp.eq.s32.totalorder %s14, 0
      %p109 = por %p107, %p108
      %p110 = scmp.ne.s32.totalorder %s102, %s104
      %p111 = scmp.eq.s32.totalorder %s19, 3
      %p112 = por %p110, %p111
      %p113 = scmp.ne.s32.totalorder %s104, %s105
      %p114 = scmp.eq.s32.totalorder %s19, 0
      %p115 = por %p113, %p114
      %p116 = scmp.ne.s32.totalorder %s104, %s105
      %p117 = scmp.eq.s32.totalorder %s20, 3
      %p118 = por %p116, %p117
      %p120 = scmp.ne.s32.totalorder %s105, %s119
      %p121 = scmp.eq.s32.totalorder %s20, 0
      %p122 = por %p120, %p121
      %s124 = sadd.s32 %s123, 1
      %p127 = scmp.eq.s32.totalorder %s14, 3
      %p128 = scmp.ne.s32.totalorder %s123, %s125
      %p129 = scmp.eq.s32.totalorder %s14, 0
      %p130 = por %p128, %p129
      %p131 = scmp.ne.s32.totalorder %s123, %s125
      %p132 = scmp.eq.s32.totalorder %s19, 3
      %p133 = por %p131, %p132
      %p134 = scmp.ne.s32.totalorder %s125, %s126
      %p135 = scmp.eq.s32.totalorder %s19, 0
      %p136 = por %p134, %p135
      %p137 = scmp.ne.s32.totalorder %s125, %s126
      %p138 = scmp.eq.s32.totalorder %s20, 3
      %p139 = por %p137, %p138
      %p141 = scmp.ne.s32.totalorder %s126, %s140
      %p142 = scmp.eq.s32.totalorder %s20, 0
      %p143 = por %p141, %p142
      %s144 = ssub.s32 %s21, %s33
      %s145 = ssub.s32 %s22, %s29
      %s146 = sor.u32 %s144, %s145
      %p147 = scmp.eq.s32.totalorder %s146, 0
      %s149 = sadd.s32 %s148, 1
      %s150 = scalar_select %p147, %s148, %s149
      %p153 = pneg %p147
      %p154 = scmp.eq.s32.totalorder %s14, 3
      %p155 = por %p153, %p154
      %p156 = scmp.ne.s32.totalorder %s148, %s151
      %p157 = scmp.eq.s32.totalorder %s14, 0
      %p158 = por %p156, %p157
      %p159 = scmp.ne.s32.totalorder %s148, %s151
      %p160 = scmp.eq.s32.totalorder %s19, 3
      %p161 = por %p159, %p160
      %p162 = scmp.ne.s32.totalorder %s151, %s152
      %p163 = scmp.eq.s32.totalorder %s19, 0
      %p164 = por %p162, %p163
      %p165 = scmp.ne.s32.totalorder %s151, %s152
      %p166 = scmp.eq.s32.totalorder %s20, 3
      %p167 = por %p165, %p166
      %p169 = scmp.ne.s32.totalorder %s152, %s168
      %p170 = scmp.eq.s32.totalorder %s20, 0
      %p171 = por %p169, %p170
      %p172 = scmp.le.s32.totalorder 1, %s14
      %p173 = scmp.lt.s32.totalorder %s14, 5
      %p174 = pnand %p172, %p173
      %p175 = pneg %p174
      // Predicated region
      $region9: #{tpu_custom_call.1} parent=5 // pred_check
        _
      $region10: #{tpu_custom_call.1} parent=5 // pred_check_branch
        %177 = sbr.rel (%p174) target = $region12
      $region11: #{tpu_custom_call.1} parent=5 // pred_region
        %s178 = ssub.s32 %s14, 1
        // Predicated region
        $region13: #{tpu_custom_call.1} parent=11 // pred_check
          %p179 = pneg %p73
        $region14: #{tpu_custom_call.1} parent=11 // pred_check_branch
          %181 = sbr.rel (%p179) target = $region16
        $region15: #{tpu_custom_call.1} parent=11 // pred_region
          _
        $region16: #{tpu_custom_call.1} parent=11 // pred_fallthru
          _
        // Predicated region
        $region17: #{tpu_custom_call.1} parent=11 // pred_check
          %p182 = pneg %p94
        $region18: #{tpu_custom_call.1} parent=11 // pred_check_branch
          %184 = sbr.rel (%p182) target = $region20
        $region19: #{tpu_custom_call.1} parent=11 // pred_region
          _
        $region20: #{tpu_custom_call.1} parent=11 // pred_fallthru
          _
        // Predicated region
        $region21: #{tpu_custom_call.1} parent=11 // pred_check
          %p185 = pneg %p115
        $region22: #{tpu_custom_call.1} parent=11 // pred_check_branch
          %187 = sbr.rel (%p185) target = $region24
        $region23: #{tpu_custom_call.1} parent=11 // pred_region
          _
        $region24: #{tpu_custom_call.1} parent=11 // pred_fallthru
          _
        // Predicated region
        $region25: #{tpu_custom_call.1} parent=11 // pred_check
          %p188 = pneg %p136
        $region26: #{tpu_custom_call.1} parent=11 // pred_check_branch
          %190 = sbr.rel (%p188) target = $region28
        $region27: #{tpu_custom_call.1} parent=11 // pred_region
          _
        $region28: #{tpu_custom_call.1} parent=11 // pred_fallthru
          _
      $region12: #{tpu_custom_call.1} parent=5 // pred_fallthru
        _
      %p191 = scmp.lt.s32.totalorder %s14, 4
      // Predicated region
      $region29: #{tpu_custom_call.1} parent=5 // pred_check
        %p192 = pneg %p191
      $region30: #{tpu_custom_call.1} parent=5 // pred_check_branch
        %194 = sbr.rel (%p192) target = $region32
      $region31: #{tpu_custom_call.1} parent=5 // pred_region
        // Predicated region
        $region33: #{tpu_custom_call.1} parent=31 // pred_check
          %p195 = pneg %p46
        $region34: #{tpu_custom_call.1} parent=31 // pred_check_branch
          %197 = sbr.rel (%p195) target = $region36
        $region35: #{tpu_custom_call.1} parent=31 // pred_region
          %p198 = scmp.lt.s32.totalorder %s21, 1
          %s199 = scalar_select %p198, %s21, 1
          %s200 = smul.addr %s199, 54
          %s201 = smul.addr %s200, 8
          %s202 = scalar_lea.vmem %s0, %s201
        $region36: #{tpu_custom_call.1} parent=31 // pred_fallthru
          _
      $region32: #{tpu_custom_call.1} parent=5 // pred_fallthru
        _
      %p203 = scmp.le.s32.totalorder 1, %s14
      %p204 = scmp.lt.s32.totalorder %s14, 5
      %p205 = pnand %p203, %p204
      %p206 = pneg %p205
      // Predicated region
      $region37: #{tpu_custom_call.1} parent=5 // pred_check
        _
      $region38: #{tpu_custom_call.1} parent=5 // pred_check_branch
        %208 = sbr.rel (%p205) target = $region40
      $region39: #{tpu_custom_call.1} parent=5 // pred_region
        %s209 = ssub.s32 %s14, 1
        %p210 = scmp.lt.s32.totalorder %s23, 1
        %s211 = scalar_select %p210, %s23, 1
        %s212 = smul.addr %s211, 54
        %s213 = smul.addr %s212, 8
        %s214 = scalar_lea.vmem %s0, %s213
        %p215 = pneg %p52
        %p216 = pneg %p49
        %p217 = pneg %p73
        %p218 = pneg %p70
        %p219 = pneg %p94
        %p220 = pneg %p91
        %p221 = pneg %p115
        %p222 = pneg %p112
        %p223 = pneg %p136
        %p224 = pneg %p133
        %p225 = pneg %p164
        %p226 = pneg %p161
        %s227 = sand.u32 %s151, 1
        %s228 = scalar_lea.sflag [#allocation3], %s227
        %s229 = sand.u32 %s151, 1
        %s230 = smul.addr %s229, 128
        %s231 = scalar_lea.vmem [#allocation2], %s230
        %p232 = scmp.lt.s32.totalorder %s23, 1
        %s233 = scalar_select %p232, %s23, 1
        %s234 = smul.addr %s233, 54
        %s235 = smul.addr %s234, 8
        %s236 = scalar_lea.vmem %s0, %s235
        %s237 = smul.u32 16, %s24
        %s238 = smul.u32 %s24, 8
        %s239 = smul.u32 %s238, 24
        %s240 = scalar_lea.vmem %s236, %s239
        %v241 = vld [vmem:[%s240] sm:$0xff]
        %v242 = vld [vmem:[%s240 + $0x8] sm:$0xff]
        %v243 = vld [vmem:[%s240 + $0x18] sm:$0xff]
        %v244 = vld [vmem:[%s240 + $0x20] sm:$0xff]
        %v245 = vld [vmem:[%s240 + $0x30] sm:$0xff]
        %v246 = vld [vmem:[%s240 + $0x38] sm:$0xff]
        %v247 = vld [vmem:[%s240 + $0x48] sm:$0xff]
        %v248 = vld [vmem:[%s240 + $0x50] sm:$0xff]
        %v249 = vld [vmem:[%s240 + $0x60] sm:$0xff]
        %v250 = vld [vmem:[%s240 + $0x68] sm:$0xff]
        %v251 = vld [vmem:[%s240 + $0x78] sm:$0xff]
        %v252 = vld [vmem:[%s240 + $0x80] sm:$0xff]
        %v253 = vld [vmem:[%s240 + $0x90] sm:$0xff]
        %v254 = vld [vmem:[%s240 + $0x98] sm:$0xff]
        %v255 = vld [vmem:[%s240 + $0xa8] sm:$0xff]
        %v256 = vld [vmem:[%s240 + $0xb0] sm:$0xff]
        %v257 = vld [vmem:[%s240 + $0x1] sm:$0xff]
        %v258 = vld [vmem:[%s240 + $0x9] sm:$0xff]
        %v259 = vld [vmem:[%s240 + $0x19] sm:$0xff]
        %v260 = vld [vmem:[%s240 + $0x21] sm:$0xff]
        %v261 = vld [vmem:[%s240 + $0x31] sm:$0xff]
        %v262 = vld [vmem:[%s240 + $0x39] sm:$0xff]
        %v263 = vld [vmem:[%s240 + $0x49] sm:$0xff]
        %v264 = vld [vmem:[%s240 + $0x51] sm:$0xff]
        %v265 = vld [vmem:[%s240 + $0x61] sm:$0xff]
        %v266 = vld [vmem:[%s240 + $0x69] sm:$0xff]
        %v267 = vld [vmem:[%s240 + $0x79] sm:$0xff]
        %v268 = vld [vmem:[%s240 + $0x81] sm:$0xff]
        %v269 = vld [vmem:[%s240 + $0x91] sm:$0xff]
        %v270 = vld [vmem:[%s240 + $0x99] sm:$0xff]
        %v271 = vld [vmem:[%s240 + $0xa9] sm:$0xff]
        %v272 = vld [vmem:[%s240 + $0xb1] sm:$0xff]
        %v273 = vld [vmem:[%s240 + $0x2] sm:$0xff]
        %v274 = vld [vmem:[%s240 + $0xa] sm:$0xff]
        %v275 = vld [vmem:[%s240 + $0x1a] sm:$0xff]
        %v276 = vld [vmem:[%s240 + $0x22] sm:$0xff]
        %v277 = vld [vmem:[%s240 + $0x32] sm:$0xff]
        %v278 = vld [vmem:[%s240 + $0x3a] sm:$0xff]
        %v279 = vld [vmem:[%s240 + $0x4a] sm:$0xff]
        %v280 = vld [vmem:[%s240 + $0x52] sm:$0xff]
        %v281 = vld [vmem:[%s240 + $0x62] sm:$0xff]
        %v282 = vld [vmem:[%s240 + $0x6a] sm:$0xff]
        %v283 = vld [vmem:[%s240 + $0x7a] sm:$0xff]
        %v284 = vld [vmem:[%s240 + $0x82] sm:$0xff]
        %v285 = vld [vmem:[%s240 + $0x92] sm:$0xff]
        %v286 = vld [vmem:[%s240 + $0x9a] sm:$0xff]
        %v287 = vld [vmem:[%s240 + $0xaa] sm:$0xff]
        %v288 = vld [vmem:[%s240 + $0xb2] sm:$0xff]
        %s289 = sadd.s32 %s238, 1
        %s290 = smul.u32 %s289, 24
        %s291 = scalar_lea.vmem %s236, %s290
        %v292 = vld [vmem:[%s291] sm:$0xff]
        %v293 = vld [vmem:[%s291 + $0x8] sm:$0xff]
        %v294 = vld [vmem:[%s291 + $0x18] sm:$0xff]
        %v295 = vld [vmem:[%s291 + $0x20] sm:$0xff]
        %v296 = vld [vmem:[%s291 + $0x30] sm:$0xff]
        %v297 = vld [vmem:[%s291 + $0x38] sm:$0xff]
        %v298 = vld [vmem:[%s291 + $0x48] sm:$0xff]
        %v299 = vld [vmem:[%s291 + $0x50] sm:$0xff]
        %v300 = vld [vmem:[%s291 + $0x60] sm:$0xff]
        %v301 = vld [vmem:[%s291 + $0x68] sm:$0xff]
        %v302 = vld [vmem:[%s291 + $0x78] sm:$0xff]
        %v303 = vld [vmem:[%s291 + $0x80] sm:$0xff]
        %v304 = vld [vmem:[%s291 + $0x90] sm:$0xff]
        %v305 = vld [vmem:[%s291 + $0x98] sm:$0xff]
        %v306 = vld [vmem:[%s291 + $0xa8] sm:$0xff]
        %v307 = vld [vmem:[%s291 + $0xb0] sm:$0xff]
        %v308 = vld [vmem:[%s291 + $0x1] sm:$0xff]
        %v309 = vld [vmem:[%s291 + $0x9] sm:$0xff]
        %v310 = vld [vmem:[%s291 + $0x19] sm:$0xff]
        %v311 = vld [vmem:[%s291 + $0x21] sm:$0xff]
        %v312 = vld [vmem:[%s291 + $0x31] sm:$0xff]
        %v313 = vld [vmem:[%s291 + $0x39] sm:$0xff]
        %v314 = vld [vmem:[%s291 + $0x49] sm:$0xff]
        %v315 = vld [vmem:[%s291 + $0x51] sm:$0xff]
        %v316 = vld [vmem:[%s291 + $0x61] sm:$0xff]
        %v317 = vld [vmem:[%s291 + $0x69] sm:$0xff]
        %v318 = vld [vmem:[%s291 + $0x79] sm:$0xff]
        %v319 = vld [vmem:[%s291 + $0x81] sm:$0xff]
        %v320 = vld [vmem:[%s291 + $0x91] sm:$0xff]
        %v321 = vld [vmem:[%s291 + $0x99] sm:$0xff]
        %v322 = vld [vmem:[%s291 + $0xa9] sm:$0xff]
        %v323 = vld [vmem:[%s291 + $0xb1] sm:$0xff]
        %v324 = vld [vmem:[%s291 + $0x2] sm:$0xff]
        %v325 = vld [vmem:[%s291 + $0xa] sm:$0xff]
        %v326 = vld [vmem:[%s291 + $0x1a] sm:$0xff]
        %v327 = vld [vmem:[%s291 + $0x22] sm:$0xff]
        %v328 = vld [vmem:[%s291 + $0x32] sm:$0xff]
        %v329 = vld [vmem:[%s291 + $0x3a] sm:$0xff]
        %v330 = vld [vmem:[%s291 + $0x4a] sm:$0xff]
        %v331 = vld [vmem:[%s291 + $0x52] sm:$0xff]
        %v332 = vld [vmem:[%s291 + $0x62] sm:$0xff]
        %v333 = vld [vmem:[%s291 + $0x6a] sm:$0xff]
        %v334 = vld [vmem:[%s291 + $0x7a] sm:$0xff]
        %v335 = vld [vmem:[%s291 + $0x82] sm:$0xff]
        %v336 = vld [vmem:[%s291 + $0x92] sm:$0xff]
        %v337 = vld [vmem:[%s291 + $0x9a] sm:$0xff]
        %v338 = vld [vmem:[%s291 + $0xaa] sm:$0xff]
        %v339 = vld [vmem:[%s291 + $0xb2] sm:$0xff]
        %s340 = sadd.s32 %s238, 2
        %s341 = smul.u32 %s340, 24
        %s342 = scalar_lea.vmem %s236, %s341
        %v343 = vld [vmem:[%s342] sm:$0xff]
        %v344 = vld [vmem:[%s342 + $0x8] sm:$0xff]
        %v345 = vld [vmem:[%s342 + $0x18] sm:$0xff]
        %v346 = vld [vmem:[%s342 + $0x20] sm:$0xff]
        %v347 = vld [vmem:[%s342 + $0x30] sm:$0xff]
        %v348 = vld [vmem:[%s342 + $0x38] sm:$0xff]
        %v349 = vld [vmem:[%s342 + $0x48] sm:$0xff]
        %v350 = vld [vmem:[%s342 + $0x50] sm:$0xff]
        %v351 = vld [vmem:[%s342 + $0x60] sm:$0xff]
        %v352 = vld [vmem:[%s342 + $0x68] sm:$0xff]
        %v353 = vld [vmem:[%s342 + $0x78] sm:$0xff]
        %v354 = vld [vmem:[%s342 + $0x80] sm:$0xff]
        %v355 = vld [vmem:[%s342 + $0x90] sm:$0xff]
        %v356 = vld [vmem:[%s342 + $0x98] sm:$0xff]
        %v357 = vld [vmem:[%s342 + $0xa8] sm:$0xff]
        %v358 = vld [vmem:[%s342 + $0xb0] sm:$0xff]
        %v359 = vld [vmem:[%s342 + $0x1] sm:$0xff]
        %v360 = vld [vmem:[%s342 + $0x9] sm:$0xff]
        %v361 = vld [vmem:[%s342 + $0x19] sm:$0xff]
        %v362 = vld [vmem:[%s342 + $0x21] sm:$0xff]
        %v363 = vld [vmem:[%s342 + $0x31] sm:$0xff]
        %v364 = vld [vmem:[%s342 + $0x39] sm:$0xff]
        %v365 = vld [vmem:[%s342 + $0x49] sm:$0xff]
        %v366 = vld [vmem:[%s342 + $0x51] sm:$0xff]
        %v367 = vld [vmem:[%s342 + $0x61] sm:$0xff]
        %v368 = vld [vmem:[%s342 + $0x69] sm:$0xff]
        %v369 = vld [vmem:[%s342 + $0x79] sm:$0xff]
        %v370 = vld [vmem:[%s342 + $0x81] sm:$0xff]
        %v371 = vld [vmem:[%s342 + $0x91] sm:$0xff]
        %v372 = vld [vmem:[%s342 + $0x99] sm:$0xff]
        %v373 = vld [vmem:[%s342 + $0xa9] sm:$0xff]
        %v374 = vld [vmem:[%s342 + $0xb1] sm:$0xff]
        %v375 = vld [vmem:[%s342 + $0x2] sm:$0xff]
        %v376 = vld [vmem:[%s342 + $0xa] sm:$0xff]
        %v377 = vld [vmem:[%s342 + $0x1a] sm:$0xff]
        %v378 = vld [vmem:[%s342 + $0x22] sm:$0xff]
        %v379 = vld [vmem:[%s342 + $0x32] sm:$0xff]
        %v380 = vld [vmem:[%s342 + $0x3a] sm:$0xff]
        %v381 = vld [vmem:[%s342 + $0x4a] sm:$0xff]
        %v382 = vld [vmem:[%s342 + $0x52] sm:$0xff]
        %v383 = vld [vmem:[%s342 + $0x62] sm:$0xff]
        %v384 = vld [vmem:[%s342 + $0x6a] sm:$0xff]
        %v385 = vld [vmem:[%s342 + $0x7a] sm:$0xff]
        %v386 = vld [vmem:[%s342 + $0x82] sm:$0xff]
        %v387 = vld [vmem:[%s342 + $0x92] sm:$0xff]
        %v388 = vld [vmem:[%s342 + $0x9a] sm:$0xff]
        %v389 = vld [vmem:[%s342 + $0xaa] sm:$0xff]
        %v390 = vld [vmem:[%s342 + $0xb2] sm:$0xff]
        %407 = vrot.lane.b32.xlu0 %v257, 8
        %v408 = vpop.permute.xlu0 %407
        %409 = vrot.lane.b32.xlu0 %v258, 8
        %v410 = vpop.permute.xlu0 %409
        %411 = vrot.lane.b32.xlu0 %v259, 8
        %v412 = vpop.permute.xlu0 %411
        %413 = vrot.lane.b32.xlu0 %v260, 8
        %v414 = vpop.permute.xlu0 %413
        %415 = vrot.lane.b32.xlu0 %v261, 8
        %v416 = vpop.permute.xlu0 %415
        %417 = vrot.lane.b32.xlu0 %v262, 8
        %v418 = vpop.permute.xlu0 %417
        %419 = vrot.lane.b32.xlu0 %v263, 8
        %v420 = vpop.permute.xlu0 %419
        %421 = vrot.lane.b32.xlu0 %v264, 8
        %v422 = vpop.permute.xlu0 %421
        %423 = vrot.lane.b32.xlu0 %v265, 8
        %v424 = vpop.permute.xlu0 %423
        %425 = vrot.lane.b32.xlu0 %v266, 8
        %v426 = vpop.permute.xlu0 %425
        %427 = vrot.lane.b32.xlu0 %v267, 8
        %v428 = vpop.permute.xlu0 %427
        %429 = vrot.lane.b32.xlu0 %v268, 8
        %v430 = vpop.permute.xlu0 %429
        %431 = vrot.lane.b32.xlu0 %v269, 8
        %v432 = vpop.permute.xlu0 %431
        %433 = vrot.lane.b32.xlu0 %v270, 8
        %v434 = vpop.permute.xlu0 %433
        %435 = vrot.lane.b32.xlu0 %v271, 8
        %v436 = vpop.permute.xlu0 %435
        %437 = vrot.lane.b32.xlu0 %v272, 8
        %v438 = vpop.permute.xlu0 %437
        %471 = vrot.lane.b32.xlu0 %v273, 16
        %v472 = vpop.permute.xlu0 %471
        %473 = vrot.lane.b32.xlu0 %v274, 16
        %v474 = vpop.permute.xlu0 %473
        %475 = vrot.lane.b32.xlu0 %v275, 16
        %v476 = vpop.permute.xlu0 %475
        %477 = vrot.lane.b32.xlu0 %v276, 16
        %v478 = vpop.permute.xlu0 %477
        %479 = vrot.lane.b32.xlu0 %v277, 16
        %v480 = vpop.permute.xlu0 %479
        %481 = vrot.lane.b32.xlu0 %v278, 16
        %v482 = vpop.permute.xlu0 %481
        %483 = vrot.lane.b32.xlu0 %v279, 16
        %v484 = vpop.permute.xlu0 %483
        %485 = vrot.lane.b32.xlu0 %v280, 16
        %v486 = vpop.permute.xlu0 %485
        %487 = vrot.lane.b32.xlu0 %v281, 16
        %v488 = vpop.permute.xlu0 %487
        %489 = vrot.lane.b32.xlu0 %v282, 16
        %v490 = vpop.permute.xlu0 %489
        %491 = vrot.lane.b32.xlu0 %v283, 16
        %v492 = vpop.permute.xlu0 %491
        %493 = vrot.lane.b32.xlu0 %v284, 16
        %v494 = vpop.permute.xlu0 %493
        %495 = vrot.lane.b32.xlu0 %v285, 16
        %v496 = vpop.permute.xlu0 %495
        %497 = vrot.lane.b32.xlu0 %v286, 16
        %v498 = vpop.permute.xlu0 %497
        %499 = vrot.lane.b32.xlu0 %v287, 16
        %v500 = vpop.permute.xlu0 %499
        %501 = vrot.lane.b32.xlu0 %v288, 16
        %v502 = vpop.permute.xlu0 %501
        %535 = vrot.lane.b32.xlu0 %v292, 24
        %v536 = vpop.permute.xlu0 %535
        %537 = vrot.lane.b32.xlu0 %v293, 24
        %v538 = vpop.permute.xlu0 %537
        %539 = vrot.lane.b32.xlu0 %v294, 24
        %v540 = vpop.permute.xlu0 %539
        %541 = vrot.lane.b32.xlu0 %v295, 24
        %v542 = vpop.permute.xlu0 %541
        %543 = vrot.lane.b32.xlu0 %v296, 24
        %v544 = vpop.permute.xlu0 %543
        %545 = vrot.lane.b32.xlu0 %v297, 24
        %v546 = vpop.permute.xlu0 %545
        %547 = vrot.lane.b32.xlu0 %v298, 24
        %v548 = vpop.permute.xlu0 %547
        %549 = vrot.lane.b32.xlu0 %v299, 24
        %v550 = vpop.permute.xlu0 %549
        %551 = vrot.lane.b32.xlu0 %v300, 24
        %v552 = vpop.permute.xlu0 %551
        %553 = vrot.lane.b32.xlu0 %v301, 24
        %v554 = vpop.permute.xlu0 %553
        %555 = vrot.lane.b32.xlu0 %v302, 24
        %v556 = vpop.permute.xlu0 %555
        %557 = vrot.lane.b32.xlu0 %v303, 24
        %v558 = vpop.permute.xlu0 %557
        %559 = vrot.lane.b32.xlu0 %v304, 24
        %v560 = vpop.permute.xlu0 %559
        %561 = vrot.lane.b32.xlu0 %v305, 24
        %v562 = vpop.permute.xlu0 %561
        %563 = vrot.lane.b32.xlu0 %v306, 24
        %v564 = vpop.permute.xlu0 %563
        %565 = vrot.lane.b32.xlu0 %v307, 24
        %v566 = vpop.permute.xlu0 %565
        %599 = vrot.lane.b32.xlu0 %v308, 32
        %v600 = vpop.permute.xlu0 %599
        %601 = vrot.lane.b32.xlu0 %v309, 32
        %v602 = vpop.permute.xlu0 %601
        %603 = vrot.lane.b32.xlu0 %v310, 32
        %v604 = vpop.permute.xlu0 %603
        %605 = vrot.lane.b32.xlu0 %v311, 32
        %v606 = vpop.permute.xlu0 %605
        %607 = vrot.lane.b32.xlu0 %v312, 32
        %v608 = vpop.permute.xlu0 %607
        %609 = vrot.lane.b32.xlu0 %v313, 32
        %v610 = vpop.permute.xlu0 %609
        %611 = vrot.lane.b32.xlu0 %v314, 32
        %v612 = vpop.permute.xlu0 %611
        %613 = vrot.lane.b32.xlu0 %v315, 32
        %v614 = vpop.permute.xlu0 %613
        %615 = vrot.lane.b32.xlu0 %v316, 32
        %v616 = vpop.permute.xlu0 %615
        %617 = vrot.lane.b32.xlu0 %v317, 32
        %v618 = vpop.permute.xlu0 %617
        %619 = vrot.lane.b32.xlu0 %v318, 32
        %v620 = vpop.permute.xlu0 %619
        %621 = vrot.lane.b32.xlu0 %v319, 32
        %v622 = vpop.permute.xlu0 %621
        %623 = vrot.lane.b32.xlu0 %v320, 32
        %v624 = vpop.permute.xlu0 %623
        %625 = vrot.lane.b32.xlu0 %v321, 32
        %v626 = vpop.permute.xlu0 %625
        %627 = vrot.lane.b32.xlu0 %v322, 32
        %v628 = vpop.permute.xlu0 %627
        %629 = vrot.lane.b32.xlu0 %v323, 32
        %v630 = vpop.permute.xlu0 %629
        %663 = vrot.lane.b32.xlu0 %v324, 40
        %v664 = vpop.permute.xlu0 %663
        %665 = vrot.lane.b32.xlu0 %v325, 40
        %v666 = vpop.permute.xlu0 %665
        %667 = vrot.lane.b32.xlu0 %v326, 40
        %v668 = vpop.permute.xlu0 %667
        %669 = vrot.lane.b32.xlu0 %v327, 40
        %v670 = vpop.permute.xlu0 %669
        %671 = vrot.lane.b32.xlu0 %v328, 40
        %v672 = vpop.permute.xlu0 %671
        %673 = vrot.lane.b32.xlu0 %v329, 40
        %v674 = vpop.permute.xlu0 %673
        %675 = vrot.lane.b32.xlu0 %v330, 40
        %v676 = vpop.permute.xlu0 %675
        %677 = vrot.lane.b32.xlu0 %v331, 40
        %v678 = vpop.permute.xlu0 %677
        %679 = vrot.lane.b32.xlu0 %v332, 40
        %v680 = vpop.permute.xlu0 %679
        %681 = vrot.lane.b32.xlu0 %v333, 40
        %v682 = vpop.permute.xlu0 %681
        %683 = vrot.lane.b32.xlu0 %v334, 40
        %v684 = vpop.permute.xlu0 %683
        %685 = vrot.lane.b32.xlu0 %v335, 40
        %v686 = vpop.permute.xlu0 %685
        %687 = vrot.lane.b32.xlu0 %v336, 40
        %v688 = vpop.permute.xlu0 %687
        %689 = vrot.lane.b32.xlu0 %v337, 40
        %v690 = vpop.permute.xlu0 %689
        %691 = vrot.lane.b32.xlu0 %v338, 40
        %v692 = vpop.permute.xlu0 %691
        %693 = vrot.lane.b32.xlu0 %v339, 40
        %v694 = vpop.permute.xlu0 %693
        %727 = vrot.lane.b32.xlu0 %v343, 48
        %v728 = vpop.permute.xlu0 %727
        %729 = vrot.lane.b32.xlu0 %v344, 48
        %v730 = vpop.permute.xlu0 %729
        %731 = vrot.lane.b32.xlu0 %v345, 48
        %v732 = vpop.permute.xlu0 %731
        %733 = vrot.lane.b32.xlu0 %v346, 48
        %v734 = vpop.permute.xlu0 %733
        %735 = vrot.lane.b32.xlu0 %v347, 48
        %v736 = vpop.permute.xlu0 %735
        %737 = vrot.lane.b32.xlu0 %v348, 48
        %v738 = vpop.permute.xlu0 %737
        %739 = vrot.lane.b32.xlu0 %v349, 48
        %v740 = vpop.permute.xlu0 %739
        %741 = vrot.lane.b32.xlu0 %v350, 48
        %v742 = vpop.permute.xlu0 %741
        %743 = vrot.lane.b32.xlu0 %v351, 48
        %v744 = vpop.permute.xlu0 %743
        %745 = vrot.lane.b32.xlu0 %v352, 48
        %v746 = vpop.permute.xlu0 %745
        %747 = vrot.lane.b32.xlu0 %v353, 48
        %v748 = vpop.permute.xlu0 %747
        %749 = vrot.lane.b32.xlu0 %v354, 48
        %v750 = vpop.permute.xlu0 %749
        %751 = vrot.lane.b32.xlu0 %v355, 48
        %v752 = vpop.permute.xlu0 %751
        %753 = vrot.lane.b32.xlu0 %v356, 48
        %v754 = vpop.permute.xlu0 %753
        %755 = vrot.lane.b32.xlu0 %v357, 48
        %v756 = vpop.permute.xlu0 %755
        %757 = vrot.lane.b32.xlu0 %v358, 48
        %v758 = vpop.permute.xlu0 %757
        %791 = vrot.lane.b32.xlu0 %v359, 56
        %v792 = vpop.permute.xlu0 %791
        %793 = vrot.lane.b32.xlu0 %v360, 56
        %v794 = vpop.permute.xlu0 %793
        %795 = vrot.lane.b32.xlu0 %v361, 56
        %v796 = vpop.permute.xlu0 %795
        %797 = vrot.lane.b32.xlu0 %v362, 56
        %v798 = vpop.permute.xlu0 %797
        %799 = vrot.lane.b32.xlu0 %v363, 56
        %v800 = vpop.permute.xlu0 %799
        %801 = vrot.lane.b32.xlu0 %v364, 56
        %v802 = vpop.permute.xlu0 %801
        %803 = vrot.lane.b32.xlu0 %v365, 56
        %v804 = vpop.permute.xlu0 %803
        %805 = vrot.lane.b32.xlu0 %v366, 56
        %v806 = vpop.permute.xlu0 %805
        %807 = vrot.lane.b32.xlu0 %v367, 56
        %v808 = vpop.permute.xlu0 %807
        %809 = vrot.lane.b32.xlu0 %v368, 56
        %v810 = vpop.permute.xlu0 %809
        %811 = vrot.lane.b32.xlu0 %v369, 56
        %v812 = vpop.permute.xlu0 %811
        %813 = vrot.lane.b32.xlu0 %v370, 56
        %v814 = vpop.permute.xlu0 %813
        %815 = vrot.lane.b32.xlu0 %v371, 56
        %v816 = vpop.permute.xlu0 %815
        %817 = vrot.lane.b32.xlu0 %v372, 56
        %v818 = vpop.permute.xlu0 %817
        %819 = vrot.lane.b32.xlu0 %v373, 56
        %v820 = vpop.permute.xlu0 %819
        %821 = vrot.lane.b32.xlu0 %v374, 56
        %v822 = vpop.permute.xlu0 %821
        %855 = vrot.lane.b32.xlu0 %v375, 64
        %v856 = vpop.permute.xlu0 %855
        %857 = vrot.lane.b32.xlu0 %v376, 64
        %v858 = vpop.permute.xlu0 %857
        %859 = vrot.lane.b32.xlu0 %v377, 64
        %v860 = vpop.permute.xlu0 %859
        %861 = vrot.lane.b32.xlu0 %v378, 64
        %v862 = vpop.permute.xlu0 %861
        %863 = vrot.lane.b32.xlu0 %v379, 64
        %v864 = vpop.permute.xlu0 %863
        %865 = vrot.lane.b32.xlu0 %v380, 64
        %v866 = vpop.permute.xlu0 %865
        %867 = vrot.lane.b32.xlu0 %v381, 64
        %v868 = vpop.permute.xlu0 %867
        %869 = vrot.lane.b32.xlu0 %v382, 64
        %v870 = vpop.permute.xlu0 %869
        %871 = vrot.lane.b32.xlu0 %v383, 64
        %v872 = vpop.permute.xlu0 %871
        %873 = vrot.lane.b32.xlu0 %v384, 64
        %v874 = vpop.permute.xlu0 %873
        %875 = vrot.lane.b32.xlu0 %v385, 64
        %v876 = vpop.permute.xlu0 %875
        %877 = vrot.lane.b32.xlu0 %v386, 64
        %v878 = vpop.permute.xlu0 %877
        %879 = vrot.lane.b32.xlu0 %v387, 64
        %v880 = vpop.permute.xlu0 %879
        %881 = vrot.lane.b32.xlu0 %v388, 64
        %v882 = vpop.permute.xlu0 %881
        %883 = vrot.lane.b32.xlu0 %v389, 64
        %v884 = vpop.permute.xlu0 %883
        %885 = vrot.lane.b32.xlu0 %v390, 64
        %v886 = vpop.permute.xlu0 %885
        %vm903 = vcmask 64512
        %v904 = vsel %vm903, %v241, %v408
        %v905 = vsel %vm903, %v242, %v410
        %v906 = vsel %vm903, %v243, %v412
        %v907 = vsel %vm903, %v244, %v414
        %v908 = vsel %vm903, %v245, %v416
        %v909 = vsel %vm903, %v246, %v418
        %v910 = vsel %vm903, %v247, %v420
        %v911 = vsel %vm903, %v248, %v422
        %v912 = vsel %vm903, %v249, %v424
        %v913 = vsel %vm903, %v250, %v426
        %v914 = vsel %vm903, %v251, %v428
        %v915 = vsel %vm903, %v252, %v430
        %v916 = vsel %vm903, %v253, %v432
        %v917 = vsel %vm903, %v254, %v434
        %v918 = vsel %vm903, %v255, %v436
        %v919 = vsel %vm903, %v256, %v438
        %vm920 = vcmask 130048
        %v921 = vsel %vm920, %v904, %v472
        %v922 = vsel %vm920, %v905, %v474
        %v923 = vsel %vm920, %v906, %v476
        %v924 = vsel %vm920, %v907, %v478
        %v925 = vsel %vm920, %v908, %v480
        %v926 = vsel %vm920, %v909, %v482
        %v927 = vsel %vm920, %v910, %v484
        %v928 = vsel %vm920, %v911, %v486
        %v929 = vsel %vm920, %v912, %v488
        %v930 = vsel %vm920, %v913, %v490
        %v931 = vsel %vm920, %v914, %v492
        %v932 = vsel %vm920, %v915, %v494
        %v933 = vsel %vm920, %v916, %v496
        %v934 = vsel %vm920, %v917, %v498
        %v935 = vsel %vm920, %v918, %v500
        %v936 = vsel %vm920, %v919, %v502
        %vm937 = vcmask 195584
        %v938 = vsel %vm937, %v921, %v536
        %v939 = vsel %vm937, %v922, %v538
        %v940 = vsel %vm937, %v923, %v540
        %v941 = vsel %vm937, %v924, %v542
        %v942 = vsel %vm937, %v925, %v544
        %v943 = vsel %vm937, %v926, %v546
        %v944 = vsel %vm937, %v927, %v548
        %v945 = vsel %vm937, %v928, %v550
        %v946 = vsel %vm937, %v929, %v552
        %v947 = vsel %vm937, %v930, %v554
        %v948 = vsel %vm937, %v931, %v556
        %v949 = vsel %vm937, %v932, %v558
        %v950 = vsel %vm937, %v933, %v560
        %v951 = vsel %vm937, %v934, %v562
        %v952 = vsel %vm937, %v935, %v564
        %v953 = vsel %vm937, %v936, %v566
        %vm954 = vcmask 261120
        %v955 = vsel %vm954, %v938, %v600
        %v956 = vsel %vm954, %v939, %v602
        %v957 = vsel %vm954, %v940, %v604
        %v958 = vsel %vm954, %v941, %v606
        %v959 = vsel %vm954, %v942, %v608
        %v960 = vsel %vm954, %v943, %v610
        %v961 = vsel %vm954, %v944, %v612
        %v962 = vsel %vm954, %v945, %v614
        %v963 = vsel %vm954, %v946, %v616
        %v964 = vsel %vm954, %v947, %v618
        %v965 = vsel %vm954, %v948, %v620
        %v966 = vsel %vm954, %v949, %v622
        %v967 = vsel %vm954, %v950, %v624
        %v968 = vsel %vm954, %v951, %v626
        %v969 = vsel %vm954, %v952, %v628
        %v970 = vsel %vm954, %v953, %v630
        %vm971 = vcmask 326656
        %v972 = vsel %vm971, %v955, %v664
        %v973 = vsel %vm971, %v956, %v666
        %v974 = vsel %vm971, %v957, %v668
        %v975 = vsel %vm971, %v958, %v670
        %v976 = vsel %vm971, %v959, %v672
        %v977 = vsel %vm971, %v960, %v674
        %v978 = vsel %vm971, %v961, %v676
        %v979 = vsel %vm971, %v962, %v678
        %v980 = vsel %vm971, %v963, %v680
        %v981 = vsel %vm971, %v964, %v682
        %v982 = vsel %vm971, %v965, %v684
        %v983 = vsel %vm971, %v966, %v686
        %v984 = vsel %vm971, %v967, %v688
        %v985 = vsel %vm971, %v968, %v690
        %v986 = vsel %vm971, %v969, %v692
        %v987 = vsel %vm971, %v970, %v694
        %vm988 = vcmask 392192
        %v989 = vsel %vm988, %v972, %v728
        %v990 = vsel %vm988, %v973, %v730
        %v991 = vsel %vm988, %v974, %v732
        %v992 = vsel %vm988, %v975, %v734
        %v993 = vsel %vm988, %v976, %v736
        %v994 = vsel %vm988, %v977, %v738
        %v995 = vsel %vm988, %v978, %v740
        %v996 = vsel %vm988, %v979, %v742
        %v997 = vsel %vm988, %v980, %v744
        %v998 = vsel %vm988, %v981, %v746
        %v999 = vsel %vm988, %v982, %v748
        %v1000 = vsel %vm988, %v983, %v750
        %v1001 = vsel %vm988, %v984, %v752
        %v1002 = vsel %vm988, %v985, %v754
        %v1003 = vsel %vm988, %v986, %v756
        %v1004 = vsel %vm988, %v987, %v758
        %vm1005 = vcmask 457728
        %v1006 = vsel %vm1005, %v989, %v792
        %v1007 = vsel %vm1005, %v990, %v794
        %v1008 = vsel %vm1005, %v991, %v796
        %v1009 = vsel %vm1005, %v992, %v798
        %v1010 = vsel %vm1005, %v993, %v800
        %v1011 = vsel %vm1005, %v994, %v802
        %v1012 = vsel %vm1005, %v995, %v804
        %v1013 = vsel %vm1005, %v996, %v806
        %v1014 = vsel %vm1005, %v997, %v808
        %v1015 = vsel %vm1005, %v998, %v810
        %v1016 = vsel %vm1005, %v999, %v812
        %v1017 = vsel %vm1005, %v1000, %v814
        %v1018 = vsel %vm1005, %v1001, %v816
        %v1019 = vsel %vm1005, %v1002, %v818
        %v1020 = vsel %vm1005, %v1003, %v820
        %v1021 = vsel %vm1005, %v1004, %v822
        %vm1022 = vcmask 523264
        %v1023 = vsel %vm1022, %v1006, %v856
        %v1024 = vsel %vm1022, %v1007, %v858
        %v1025 = vsel %vm1022, %v1008, %v860
        %v1026 = vsel %vm1022, %v1009, %v862
        %v1027 = vsel %vm1022, %v1010, %v864
        %v1028 = vsel %vm1022, %v1011, %v866
        %v1029 = vsel %vm1022, %v1012, %v868
        %v1030 = vsel %vm1022, %v1013, %v870
        %v1031 = vsel %vm1022, %v1014, %v872
        %v1032 = vsel %vm1022, %v1015, %v874
        %v1033 = vsel %vm1022, %v1016, %v876
        %v1034 = vsel %vm1022, %v1017, %v878
        %v1035 = vsel %vm1022, %v1018, %v880
        %v1036 = vsel %vm1022, %v1019, %v882
        %v1037 = vsel %vm1022, %v1020, %v884
        %v1038 = vsel %vm1022, %v1021, %v886
        %v1039 = vld [vmem:[%s1] sm:$0xff]
        %v1040 = vld [vmem:[%s1 + $0x8] sm:$0xff]
        %v1041 = vld [vmem:[%s1 + $0x10] sm:$0xff]
        %v1042 = vld [vmem:[%s1 + $0x18] sm:$0xff]
        %v1043 = vld [vmem:[%s1 + $0x20] sm:$0xff]
        %v1044 = vld [vmem:[%s1 + $0x28] sm:$0xff]
        %v1045 = vld [vmem:[%s1 + $0x30] sm:$0xff]
        %v1046 = vld [vmem:[%s1 + $0x38] sm:$0xff]
        %v1047 = vld [vmem:[%s1 + $0x40] sm:$0xff]
        %v1048 = vld [vmem:[%s2] sm:$0x1]
        %v1050 = vperm.slane %v1048, 0
        %vm1052 = vcmask 588800
        %v1054 = vsel %vm1052, %v1023, 0
        %v1057 = vsel %vm1052, %v1024, 0
        %v1060 = vsel %vm1052, %v1025, 0
        %v1063 = vsel %vm1052, %v1026, 0
        %v1066 = vsel %vm1052, %v1027, 0
        %v1069 = vsel %vm1052, %v1028, 0
        %v1072 = vsel %vm1052, %v1029, 0
        %v1075 = vsel %vm1052, %v1030, 0
        %v1078 = vsel %vm1052, %v1031, 0
        %v1081 = vsel %vm1052, %v1032, 0
        %v1084 = vsel %vm1052, %v1033, 0
        %v1087 = vsel %vm1052, %v1034, 0
        %v1090 = vsel %vm1052, %v1035, 0
        %v1093 = vsel %vm1052, %v1036, 0
        %v1096 = vsel %vm1052, %v1037, 0
        %v1099 = vsel %vm1052, %v1038, 0
        %1101 = vmatpush.msra.mxu0 0.0
        %1102 = vmatpush.msra.mxu0 0.0
        %1103 = vmatpush.msra.mxu0 0.0
        %1104 = vmatpush.msra.mxu0 0.0
        %1105 = vmatpush.msra.mxu0 0.0
        %1106 = vmatpush.msra.mxu0 0.0
        %1107 = vmatpush.msra.mxu0 0.0
        %1108 = vmatpush.msra.mxu0 %v1047
        %1109 = vmatpush.msra.mxu0 %v1046
        %1110 = vmatpush.msra.mxu0 %v1045
        %1111 = vmatpush.msra.mxu0 %v1044
        %1112 = vmatpush.msra.mxu0 %v1043
        %1113 = vmatpush.msra.mxu0 %v1042
        %1114 = vmatpush.msra.mxu0 %v1041
        %1115 = vmatpush.msra.mxu0 %v1040
        %1116 = vmatpush.msra.mxu0 %v1039
        %1117 = vmatmul.f32.gmra.mxu0 %v1054
        %v1118 = vpop.f32.mrf.mxu0
        %v1119 = vadd.f32 %v1050, %v1118
        %1120 = vmatmul.f32.gmra.mxu0 %v1057
        %v1121 = vpop.f32.mrf.mxu0
        %v1122 = vadd.f32 %v1050, %v1121
        %1123 = vmatmul.f32.gmra.mxu0 %v1060
        %v1124 = vpop.f32.mrf.mxu0
        %v1125 = vadd.f32 %v1050, %v1124
        %1126 = vmatmul.f32.gmra.mxu0 %v1063
        %v1127 = vpop.f32.mrf.mxu0
        %v1128 = vadd.f32 %v1050, %v1127
        %1129 = vmatmul.f32.gmra.mxu0 %v1066
        %v1130 = vpop.f32.mrf.mxu0
        %v1131 = vadd.f32 %v1050, %v1130
        %1132 = vmatmul.f32.gmra.mxu0 %v1069
        %v1133 = vpop.f32.mrf.mxu0
        %v1134 = vadd.f32 %v1050, %v1133
        %1135 = vmatmul.f32.gmra.mxu0 %v1072
        %v1136 = vpop.f32.mrf.mxu0
        %v1137 = vadd.f32 %v1050, %v1136
        %1138 = vmatmul.f32.gmra.mxu0 %v1075
        %v1139 = vpop.f32.mrf.mxu0
        %v1140 = vadd.f32 %v1050, %v1139
        %1141 = vmatmul.f32.gmra.mxu0 %v1078
        %v1142 = vpop.f32.mrf.mxu0
        %v1143 = vadd.f32 %v1050, %v1142
        %1144 = vmatmul.f32.gmra.mxu0 %v1081
        %v1145 = vpop.f32.mrf.mxu0
        %v1146 = vadd.f32 %v1050, %v1145
        %1147 = vmatmul.f32.gmra.mxu0 %v1084
        %v1148 = vpop.f32.mrf.mxu0
        %v1149 = vadd.f32 %v1050, %v1148
        %1150 = vmatmul.f32.gmra.mxu0 %v1087
        %v1151 = vpop.f32.mrf.mxu0
        %v1152 = vadd.f32 %v1050, %v1151
        %1153 = vmatmul.f32.gmra.mxu0 %v1090
        %v1154 = vpop.f32.mrf.mxu0
        %v1155 = vadd.f32 %v1050, %v1154
        %1156 = vmatmul.f32.gmra.mxu0 %v1093
        %v1157 = vpop.f32.mrf.mxu0
        %v1158 = vadd.f32 %v1050, %v1157
        %1159 = vmatmul.f32.gmra.mxu0 %v1096
        %v1160 = vpop.f32.mrf.mxu0
        %v1161 = vadd.f32 %v1050, %v1160
        %1162 = vmatmul.f32.gmra.mxu0 %v1099
        %v1163 = vpop.f32.mrf.mxu0
        %v1164 = vadd.f32 %v1050, %v1163
        %1165 = vdwg.mxu0
        %v1166 = vmax.f32 %v1119, 0.0
        %v1167 = vmax.f32 %v1122, 0.0
        %v1168 = vmax.f32 %v1125, 0.0
        %v1169 = vmax.f32 %v1128, 0.0
        %v1170 = vmax.f32 %v1131, 0.0
        %v1171 = vmax.f32 %v1134, 0.0
        %v1172 = vmax.f32 %v1137, 0.0
        %v1173 = vmax.f32 %v1140, 0.0
        %v1174 = vmax.f32 %v1143, 0.0
        %v1175 = vmax.f32 %v1146, 0.0
        %v1176 = vmax.f32 %v1149, 0.0
        %v1177 = vmax.f32 %v1152, 0.0
        %v1178 = vmax.f32 %v1155, 0.0
        %v1179 = vmax.f32 %v1158, 0.0
        %v1180 = vmax.f32 %v1161, 0.0
        %v1181 = vmax.f32 %v1164, 0.0
        %v1182 = vld [vmem:[%s3] sm:$0xff]
        %v1183 = vld [vmem:[%s4] sm:$0x1]
        %v1185 = vperm.slane %v1183, 0
        %v1188 = vsel %vm903, %v1166, 0
        %v1191 = vsel %vm903, %v1167, 0
        %v1194 = vsel %vm903, %v1168, 0
        %v1197 = vsel %vm903, %v1169, 0
        %v1200 = vsel %vm903, %v1170, 0
        %v1203 = vsel %vm903, %v1171, 0
        %v1206 = vsel %vm903, %v1172, 0
        %v1209 = vsel %vm903, %v1173, 0
        %v1212 = vsel %vm903, %v1174, 0
        %v1215 = vsel %vm903, %v1175, 0
        %v1218 = vsel %vm903, %v1176, 0
        %v1221 = vsel %vm903, %v1177, 0
        %v1224 = vsel %vm903, %v1178, 0
        %v1227 = vsel %vm903, %v1179, 0
        %v1230 = vsel %vm903, %v1180, 0
        %v1233 = vsel %vm903, %v1181, 0
        %1235 = vmatpush.msra.mxu0 0.0
        %1236 = vmatpush.msra.mxu0 0.0
        %1237 = vmatpush.msra.mxu0 0.0
        %1238 = vmatpush.msra.mxu0 0.0
        %1239 = vmatpush.msra.mxu0 0.0
        %1240 = vmatpush.msra.mxu0 0.0
        %1241 = vmatpush.msra.mxu0 0.0
        %1242 = vmatpush.msra.mxu0 0.0
        %1243 = vmatpush.msra.mxu0 0.0
        %1244 = vmatpush.msra.mxu0 0.0
        %1245 = vmatpush.msra.mxu0 0.0
        %1246 = vmatpush.msra.mxu0 0.0
        %1247 = vmatpush.msra.mxu0 0.0
        %1248 = vmatpush.msra.mxu0 0.0
        %1249 = vmatpush.msra.mxu0 0.0
        %1250 = vmatpush.msra.mxu0 %v1182
        %1251 = vmatmul.f32.gmra.mxu0 %v1188
        %v1252 = vpop.f32.mrf.mxu0
        %v1253 = vadd.f32 %v1185, %v1252
        %1254 = vmatmul.f32.gmra.mxu0 %v1191
        %v1255 = vpop.f32.mrf.mxu0
        %v1256 = vadd.f32 %v1185, %v1255
        %1257 = vmatmul.f32.gmra.mxu0 %v1194
        %v1258 = vpop.f32.mrf.mxu0
        %v1259 = vadd.f32 %v1185, %v1258
        %1260 = vmatmul.f32.gmra.mxu0 %v1197
        %v1261 = vpop.f32.mrf.mxu0
        %v1262 = vadd.f32 %v1185, %v1261
        %1263 = vmatmul.f32.gmra.mxu0 %v1200
        %v1264 = vpop.f32.mrf.mxu0
        %v1265 = vadd.f32 %v1185, %v1264
        %1266 = vmatmul.f32.gmra.mxu0 %v1203
        %v1267 = vpop.f32.mrf.mxu0
        %v1268 = vadd.f32 %v1185, %v1267
        %1269 = vmatmul.f32.gmra.mxu0 %v1206
        %v1270 = vpop.f32.mrf.mxu0
        %v1271 = vadd.f32 %v1185, %v1270
        %1272 = vmatmul.f32.gmra.mxu0 %v1209
        %v1273 = vpop.f32.mrf.mxu0
        %v1274 = vadd.f32 %v1185, %v1273
        %1275 = vmatmul.f32.gmra.mxu0 %v1212
        %v1276 = vpop.f32.mrf.mxu0
        %v1277 = vadd.f32 %v1185, %v1276
        %1278 = vmatmul.f32.gmra.mxu0 %v1215
        %v1279 = vpop.f32.mrf.mxu0
        %v1280 = vadd.f32 %v1185, %v1279
        %1281 = vmatmul.f32.gmra.mxu0 %v1218
        %v1282 = vpop.f32.mrf.mxu0
        %v1283 = vadd.f32 %v1185, %v1282
        %1284 = vmatmul.f32.gmra.mxu0 %v1221
        %v1285 = vpop.f32.mrf.mxu0
        %v1286 = vadd.f32 %v1185, %v1285
        %1287 = vmatmul.f32.gmra.mxu0 %v1224
        %v1288 = vpop.f32.mrf.mxu0
        %v1289 = vadd.f32 %v1185, %v1288
        %1290 = vmatmul.f32.gmra.mxu0 %v1227
        %v1291 = vpop.f32.mrf.mxu0
        %v1292 = vadd.f32 %v1185, %v1291
        %1293 = vmatmul.f32.gmra.mxu0 %v1230
        %v1294 = vpop.f32.mrf.mxu0
        %v1295 = vadd.f32 %v1185, %v1294
        %1296 = vmatmul.f32.gmra.mxu0 %v1233
        %v1297 = vpop.f32.mrf.mxu0
        %v1298 = vadd.f32 %v1185, %v1297
        %1299 = vdwg.mxu0
        %1300 = vst [vmem:[%s231] sm:$0xff] %v1253
        %1301 = vst [vmem:[%s231 + $0x8] sm:$0xff] %v1256
        %1302 = vst [vmem:[%s231 + $0x10] sm:$0xff] %v1259
        %1303 = vst [vmem:[%s231 + $0x18] sm:$0xff] %v1262
        %1304 = vst [vmem:[%s231 + $0x20] sm:$0xff] %v1265
        %1305 = vst [vmem:[%s231 + $0x28] sm:$0xff] %v1268
        %1306 = vst [vmem:[%s231 + $0x30] sm:$0xff] %v1271
        %1307 = vst [vmem:[%s231 + $0x38] sm:$0xff] %v1274
        %1308 = vst [vmem:[%s231 + $0x40] sm:$0xff] %v1277
        %1309 = vst [vmem:[%s231 + $0x48] sm:$0xff] %v1280
        %1310 = vst [vmem:[%s231 + $0x50] sm:$0xff] %v1283
        %1311 = vst [vmem:[%s231 + $0x58] sm:$0xff] %v1286
        %1312 = vst [vmem:[%s231 + $0x60] sm:$0xff] %v1289
        %1313 = vst [vmem:[%s231 + $0x68] sm:$0xff] %v1292
        %1314 = vst [vmem:[%s231 + $0x70] sm:$0xff] %v1295
        %1315 = vst [vmem:[%s231 + $0x78] sm:$0xff] %v1298
        %s1316 = sand.u32 %s151, 1
        %s1317 = scalar_lea.sflag [#allocation3], %s1316
        %s1318 = sand.u32 %s151, 1
        %s1319 = smul.addr %s1318, 128
        %s1320 = scalar_lea.vmem [#allocation2], %s1319
        // Predicated region
        $region41: #{tpu_custom_call.1} parent=39 // pred_check
          %p1321 = pneg %p161
        $region42: #{tpu_custom_call.1} parent=39 // pred_check_branch
          %1323 = sbr.rel (%p1321) target = $region44
        $region43: #{tpu_custom_call.1} parent=39 // pred_region
          %s1324 = smul.u32 16, %s24
          %1326 = vsyncadd %s1317, 0
          %s1327 = smul.addr %s23, 32
          %s1328 = sadd.s32 %s1324, %s1327
          %s1329 = smul.addr %s1328, 8
          %s1330 = scalar_lea.hbm %s5, %s1329
          %s1331 = sshll.u32 %s1320, 4
          %s1332 = int_to_ptr.vmem [resolvable:$true] %s1331
          %s1333 = sshll.u32 %s1330, 4
          %s1334 = int_to_ptr.hbm [resolvable:$true] %s1333
          %1339 = dma.vmem_to_hbm [thread:$0]  %s1332, 2048, %s1334, %s1317, 128, 128, 8
        $region44: #{tpu_custom_call.1} parent=39 // pred_fallthru
          _
      $region40: #{tpu_custom_call.1} parent=5 // pred_fallthru
        _
      %p1340 = scmp.le.s32.totalorder 2, %s14
      // Predicated region
      $region45: #{tpu_custom_call.1} parent=5 // pred_check
        %p1341 = pneg %p1340
      $region46: #{tpu_custom_call.1} parent=5 // pred_check_branch
        %1343 = sbr.rel (%p1341) target = $region48
      $region47: #{tpu_custom_call.1} parent=5 // pred_region
        %s1344 = ssub.s32 %s14, 2
        // Predicated region
        $region49: #{tpu_custom_call.1} parent=47 // pred_check
          %p1345 = pneg %p167
        $region50: #{tpu_custom_call.1} parent=47 // pred_check_branch
          %1347 = sbr.rel (%p1345) target = $region52
        $region51: #{tpu_custom_call.1} parent=47 // pred_region
          %s1348 = sand.u32 %s152, 1
          %s1349 = scalar_lea.sflag [#allocation3], %s1348
          %s1350 = sand.u32 %s152, 1
          %s1351 = smul.addr %s1350, 128
          %s1352 = scalar_lea.vmem [#allocation2], %s1351
          %1354 = dma.done %s1349, 2048
        $region52: #{tpu_custom_call.1} parent=47 // pred_fallthru
          _
      $region48: #{tpu_custom_call.1} parent=5 // pred_fallthru
        _
    $region6: #{tpu_custom_call.1} parent=1 // loop_footer
      %s18 = sadd.s32 1, %s14
    $region7: #{tpu_custom_call.1} parent=1 // loop_footer_branch
      %13 = sbr.rel target = $region3
    $region8: #{tpu_custom_call.1} parent=1 // loop_exit
      _
    %1355 = vsyncpa [#allocation3], 1
    %s1356 = scalar_lea.sflag [#allocation3], 1
    %1357 = vsyncpa %s1356, 1

</llo_original>
